<compile_context>
chip_gen: v5e
topology: v5e:2x2
jax: 0.10.0
libtpu: 0.0.40
codegen_flags: <defaults>
</compile_context>

<pallas_src>
import jax
import jax.numpy as jnp
from jax.experimental import pallas as pl
from jax.experimental.pallas import tpu as pltpu


# ----------------------------------------------------------------------------
# Generation / dtype aware sizing helpers (trace-time Python, not traced ops).
# ----------------------------------------------------------------------------
def _sublanes_for_dtype(dtype) -> int:
    itemsize = jnp.dtype(dtype).itemsize
    if itemsize >= 4:
        return 8          # f32 / i32
    if itemsize == 2:
        return 16         # bf16 / f16
    return 32             # int8 / fp8


def _chip_plan():
    """(target_block_bytes_per_buffer, vmem_limit_bytes) for this TPU generation."""
    try:
        vmem_phys = int(pltpu.get_tpu_info().vmem_capacity_bytes)
    except Exception:       # conservative fallback if the query is unavailable
        vmem_phys = 64 * 1024 * 1024
    if vmem_phys <= 64 * 1024 * 1024:
        # v7x-like: 64 MiB physical VMEM, very fast HBM -> moderate blocks,
        # tight scoped limit (4 double-buffered tiles ~= 20 MiB).
        return 5 * 1024 * 1024, 48 * 1024 * 1024
    # v5e / v6e: 128 MiB physical VMEM -> big blocks amortize the ~0.35 us
    # per-grid-step overhead (4 double-buffered tiles ~= 48 MiB).
    return 12 * 1024 * 1024, 96 * 1024 * 1024


# ----------------------------------------------------------------------------
# Pallas kernel: lane-dense pass-through tile (template for real compute).
# ----------------------------------------------------------------------------
def _identity_kernel(x_ref, o_ref):
    # BaseModel defines no computation; subclasses replace this body.
    o_ref[...] = x_ref[...]


@jax.jit
def base_model_pallas_identity(x: jax.Array) -> jax.Array:
    """Lane-dense Pallas pass-through (tiling template for subclasses).

    Flattens to a (rows, lanes) slab with lanes a multiple of 128 that divides
    x.size (no padding, no slicing), tiles it into generation-sized blocks and
    copies it through VMEM.  Falls back to a plain identity if the element
    count cannot be tiled without padding.
    """
    total = int(x.size)
    sublanes = _sublanes_for_dtype(x.dtype)
    itemsize = jnp.dtype(x.dtype).itemsize
    min_tile = sublanes * 128

    # No clean (sublane, 128)-aligned factorization -> pure identity, no pad.
    if total == 0 or total % min_tile != 0:
        return x

    # Largest lane width in {512, 256, 128} that keeps rows a sublane multiple.
    lanes = 128
    for cand in (512, 256, 128):
        if total % (cand * sublanes) == 0:
            lanes = cand
            break
    rows = total // lanes                      # multiple of `sublanes`

    target_block_bytes, vmem_limit_bytes = _chip_plan()
    block_rows = max(sublanes,
                     min(rows, target_block_bytes // (lanes * itemsize)))
    block_rows = max(sublanes, (block_rows // sublanes) * sublanes)
    # Keep >= 2 grid steps when the data is large enough so the "parallel"
    # axis can be split across v7x's two TensorCores.
    if rows >= 2 * sublanes and block_rows > rows // 2:
        block_rows = max(sublanes, ((rows // 2) // sublanes) * sublanes)
    grid = pl.cdiv(rows, block_rows)           # ragged last block is masked

    x2d = x.reshape(rows, lanes)
    y2d = pl.pallas_call(
        _identity_kernel,
        out_shape=jax.ShapeDtypeStruct((rows, lanes), x.dtype),
        grid=(grid,),
        in_specs=[pl.BlockSpec((block_rows, lanes), lambda i: (i, 0))],
        out_specs=pl.BlockSpec((block_rows, lanes), lambda i: (i, 0)),
        cost_estimate=pl.CostEstimate(
            flops=0,
            transcendentals=0,
            bytes_accessed=2 * total * itemsize,
        ),
        compiler_params=pltpu.CompilerParams(
            dimension_semantics=("parallel",),
            vmem_limit_bytes=vmem_limit_bytes,
        ),
    )(x2d)
    return y2d.reshape(x.shape)


# ----------------------------------------------------------------------------
# BaseModel translation.
# ----------------------------------------------------------------------------
def base_model_forward(x: jax.Array) -> jax.Array:
    """BaseModel has no parameters and no compute: the forward is an identity.

    Per the perf review, no kernel is launched for the pure-identity case
    (launching one only adds 2x total-bytes of HBM traffic for zero FLOPs).
    Subclasses with real compute should build on base_model_pallas_identity.
    """
    return x


class BaseModelJAX:
    """Mirror of the PyTorch BaseModel utility surface (no parameters)."""

    def __init__(self):
        self._params = {}  # BaseModel.__init__ registers nothing

    def print_architecture(self, verbose=False):
        name = type(self).__name__
        result = "-------------------%s---------------------\n" % name
        total_num_params = sum(int(p.size) for p in self._params.values())
        result += "[Network %s] Total number of parameters : %.3f M\n" % (
            name,
            total_num_params / 1_000_000.0,
        )
        result += "-----------------------------------------------\n"
        print(result)

    def set_requires_grad(self, requires_grad):
        # TODO(synk): JAX has no per-parameter requires_grad flag; gradient
        # selection is handled by the optimizer/partitioning, so this is a no-op.
        del requires_grad

    def get_parameters_for_train(self):
        return self._params

    def forward(self, x):
        # Base class has no compute; subclasses override with real kernels.
        return base_model_forward(x)


if __name__ == "__main__":
    key = jax.random.PRNGKey(0)
    # Small NCHW input consistent with typical vision-model usage.
    x = jax.random.normal(key, (2, 4, 16, 16), dtype=jnp.float32)

    model = BaseModelJAX()
    # forward() is the zero-cost identity (faithful to the no-compute base).
    y_fwd = jax.block_until_ready(model.forward(x))
    assert y_fwd.shape == x.shape and y_fwd.dtype == x.dtype

    # Exercise the Pallas tiling template once (what subclasses build on).
    y = jax.block_until_ready(base_model_pallas_identity(x))
    assert y.shape == x.shape and y.dtype == x.dtype
    assert bool(jnp.allclose(y, x))
    print("KERNEL_OK")
</pallas_src>

<mosaic_0001>
module attributes {stable_mosaic.version = 11 : i64} {
  func.func @_identity_kernel(%arg0: i32, %arg1: memref<8x256xf32, #tpu.memory_space<vmem>>, %arg2: memref<8x256xf32, #tpu.memory_space<vmem>>) attributes {dimension_semantics = [#tpu.dimension_semantics<parallel>], iteration_bounds = array<i64: 1>, scalar_prefetch = 0 : i64, scratch_operands = 0 : i64, tpu.core_type = #tpu.core_type<tc>, window_params = [{transform_indices = @transform_0, window_bounds = array<i64: 8, 256>}, {transform_indices = @transform_1, window_bounds = array<i64: 8, 256>}]} {
    %c0 = arith.constant 0 : index
    %c0_0 = arith.constant 0 : index
    %0 = vector.load %arg1[%c0, %c0_0] : memref<8x256xf32, #tpu.memory_space<vmem>>, vector<8x256xf32>
    %c0_1 = arith.constant 0 : index
    %c0_2 = arith.constant 0 : index
    %1 = vector.load %arg2[%c0_1, %c0_2] : memref<8x256xf32, #tpu.memory_space<vmem>>, vector<8x256xf32>
    tpu.vector_store %arg2[%c0_1, %c0_2], %0 {strides = array<i32>} : memref<8x256xf32, #tpu.memory_space<vmem>>, vector<8x256xf32>,
    return
  }
  func.func @transform_0(%arg0: i32) -> (i32, i32) {
    %c0_i32 = arith.constant 0 : i32
    %c0_i32_0 = arith.constant 0 : i32
    return %arg0, %c0_i32 : i32, i32
  }
  func.func @transform_1(%arg0: i32) -> (i32, i32) {
    %c0_i32 = arith.constant 0 : i32
    %c0_i32_0 = arith.constant 0 : i32
    return %arg0, %c0_i32 : i32, i32
  }
}

</mosaic_0001>

<llo_original>
// kernel: base_model_pallas_identity.1
$region0: #{base_model_pallas_identity.1}
  #allocation0 [shape = 'u32[]', space=smem, size = 0x4, offset = 0x4, fixed_abs, tag = 'smem constant byte address 0x4 - core index']
  #allocation1 [shape = 'u32[72,128]{1,0:T(1,128)}', space=vmem, size = 0x9000, scoped, tag = 'internal scratch']
  %s0 = inlined_call_operand.vmem [shape: f32[8,256], index: 0, kind: input, shape index: {}]
  %s1 = inlined_call_operand.vmem [shape: f32[8,256], index: 1, kind: output, shape index: {}]
  %s2 = sld [smem:[#allocation0]]
  $region14: #{base_model_pallas_identity.1} parent=0
    _
  %s4 = ssub.s32 1, %s2
  %s5 = scalar_select 0, %s4, %s2
  // Predicated region
  $region2: #{base_model_pallas_identity.1} parent=0 // pred_check
    _
  $region3: #{base_model_pallas_identity.1} parent=0 // pred_check_branch
    %7 = sbr.rel (0) target = $region5
  $region4: #{base_model_pallas_identity.1} parent=0 // pred_region
    _
  $region5: #{base_model_pallas_identity.1} parent=0 // pred_fallthru
    _
  %v8 = vld [vmem:[%s0] sm:$0xff]
  %v9 = vld [vmem:[%s0 + $0x8] sm:$0xff]
  %10 = vst [vmem:[%s1] sm:$0xff] %v8
  %11 = vst [vmem:[%s1 + $0x8] sm:$0xff] %v9
  // Predicated region
  $region6: #{base_model_pallas_identity.1} parent=0 // pred_check
    _
  $region7: #{base_model_pallas_identity.1} parent=0 // pred_check_branch
    %13 = sbr.rel (0) target = $region9
  $region8: #{base_model_pallas_identity.1} parent=0 // pred_region
    _
  $region9: #{base_model_pallas_identity.1} parent=0 // pred_fallthru
    _
  // Predicated region
  $region10: #{base_model_pallas_identity.1} parent=0 // pred_check
    _
  $region11: #{base_model_pallas_identity.1} parent=0 // pred_check_branch
    %15 = sbr.rel (0) target = $region13
  $region12: #{base_model_pallas_identity.1} parent=0 // pred_region
    _
  $region13: #{base_model_pallas_identity.1} parent=0 // pred_fallthru
    _

</llo_original>
